<compile_context>
chip_gen: v7x
topology: tpu7x:2x2x1
jax: 0.10.0
libtpu: 0.0.40
codegen_flags: <defaults>
</compile_context>

<pallas_src>
import functools

import jax
import jax.numpy as jnp
from jax import lax
from jax.experimental import pallas as pl
from jax.experimental.pallas import tpu as pltpu


def _instance_norm_kernel(x_ref, g_ref, b_ref, o_ref, *, eps, inv_hw):
    # x_ref: (Rb, HW)   g_ref/b_ref: (Rb, 1)   o_ref: (Rb, HW)
    x = x_ref[...].astype(jnp.float32)
    s1 = jnp.sum(x, axis=-1, keepdims=True)          # (Rb, 1)
    s2 = jnp.sum(x * x, axis=-1, keepdims=True)      # (Rb, 1)
    mean = s1 * inv_hw
    var = jnp.maximum(s2 * inv_hw - mean * mean, 0.0)  # fused one-pass, clamped
    inv_std = lax.rsqrt(var + eps)                     # EUP slot
    scale = g_ref[...].astype(jnp.float32) * inv_std   # (Rb, 1)
    shift = b_ref[...].astype(jnp.float32) - mean * scale
    # Single multiply-add per element; reads the original x (no xc temp).
    o_ref[...] = (x * scale + shift).astype(o_ref.dtype)


def _round_up(v, m):
    return ((v + m - 1) // m) * m


def _vmem_capacity_bytes():
    try:
        return int(pltpu.get_tpu_info().vmem_capacity_bytes)
    except Exception:
        return 64 << 20  # conservative fallback (v7x per-TC VMEM)


def _choose_row_block(NC, HW, elem_bytes, block_budget_bytes):
    """Pick Rb (rows per block) for a (Rb, HW) tile.

    Working set per row ~= 2x double-buffered input + 2x output blocks in the
    input dtype, plus ~2 block-sized f32 intermediates inside the kernel body.
    Rb is a multiple of 8 (sublane aligned) or the full N*C extent, and is
    capped so the grid keeps enough steps to feed both v7x TensorCores.
    """
    row_bytes = max(1, HW) * (4 * elem_bytes + 2 * 4)
    rb_fit = max(0, block_budget_bytes // row_bytes)
    rb_fit = (rb_fit // 8) * 8
    if rb_fit == 0:
        # Even an 8-row block overshoots the budget; fall back to the smallest
        # legal block and rely on the raised vmem_limit / headroom.
        # TODO(synk): add an HW-split (two-phase) path for extremely large H*W.
        rb_fit = 8
    # Keep enough grid steps so v7x's two TensorCores both get work.
    if NC >= 64:
        target = _round_up(pl.cdiv(NC, 8), 8)
    elif NC >= 16:
        target = _round_up(pl.cdiv(NC, 2), 8)
    else:
        target = _round_up(NC, 8)
    rb = min(rb_fit, target)
    if rb >= NC:
        return NC  # single full-extent block (legal even if not 8-aligned)
    return max(8, rb)


def instance_norm(x, gamma, beta, epsilon=1e-5):
    """x: (N, C, H, W); gamma, beta: (C,).  Matches PyTorch InstanceNorm2d
    (affine) forward with biased variance."""
    N, C, H, W = x.shape
    HW = H * W
    NC = N * C

    x2 = x.reshape(NC, HW)  # lane-dense rows, one per (n, c) instance
    g2 = jnp.broadcast_to(gamma[None, :], (N, C)).reshape(NC, 1)
    b2 = jnp.broadcast_to(beta[None, :], (N, C)).reshape(NC, 1)

    elem_bytes = jnp.dtype(x.dtype).itemsize
    capacity = _vmem_capacity_bytes()
    # Budget available to the pipelined blocks + in-kernel temps.
    block_budget = min(int(capacity * 0.6), 72 << 20)
    Rb = _choose_row_block(NC, HW, elem_bytes, block_budget)
    grid = (pl.cdiv(NC, Rb),)

    # Raise the scoped-VMEM limit so the chosen tile is actually usable
    # (default is only 16 MiB on v5e / 32 MiB on v6e & v7x).
    needed = Rb * max(1, HW) * (4 * elem_bytes + 2 * 4) + (1 << 20)
    vmem_limit = int(min(int(capacity * 0.9),
                         max(32 << 20, int(needed * 1.25))))

    kernel = functools.partial(_instance_norm_kernel,
                               eps=float(epsilon),
                               inv_hw=float(1.0 / HW))

    out = pl.pallas_call(
        kernel,
        out_shape=jax.ShapeDtypeStruct((NC, HW), x.dtype),
        grid_spec=pltpu.PrefetchScalarGridSpec(
            num_scalar_prefetch=0,
            grid=grid,
            in_specs=[
                pl.BlockSpec((Rb, HW), lambda r: (r, 0)),   # x rows
                pl.BlockSpec((Rb, 1), lambda r: (r, 0)),    # gamma (per row)
                pl.BlockSpec((Rb, 1), lambda r: (r, 0)),    # beta  (per row)
            ],
            out_specs=pl.BlockSpec((Rb, HW), lambda r: (r, 0)),
        ),
        compiler_params=pltpu.CompilerParams(
            dimension_semantics=("parallel",),
            vmem_limit_bytes=vmem_limit,
        ),
    )(x2, g2, b2)

    return out.reshape(N, C, H, W)


if __name__ == "__main__":
    # Small shapes consistent with InstanceNorm2d over NCHW input.
    N, C, H, W = 2, 4, 16, 16
    key = jax.random.PRNGKey(0)
    x = jax.random.normal(key, (N, C, H, W), dtype=jnp.float32)

    # Parameters matching nn.Parameter(torch.ones/zeros(C)).
    gamma = jnp.ones((C,), dtype=jnp.float32)
    beta = jnp.zeros((C,), dtype=jnp.float32)

    y = instance_norm(x, gamma, beta, epsilon=1e-5)
    y = jax.block_until_ready(y)

    # Pure-JAX reference.
    mean = jnp.mean(x, axis=(2, 3), keepdims=True)
    var = jnp.mean((x - mean) ** 2, axis=(2, 3), keepdims=True)
    ref = gamma[None, :, None, None] * (x - mean) / jnp.sqrt(var + 1e-5) \
        + beta[None, :, None, None]
    assert jnp.allclose(y, ref, atol=1e-5, rtol=1e-5), "mismatch vs reference"

    print("KERNEL_OK")
</pallas_src>

<mosaic_0001>
module attributes {stable_mosaic.version = 11 : i64} {
  func.func @_instance_norm_kernel(%arg0: i32, %arg1: memref<8x256xf32, #tpu.memory_space<vmem>>, %arg2: memref<8x1xf32, #tpu.memory_space<vmem>>, %arg3: memref<8x1xf32, #tpu.memory_space<vmem>>, %arg4: memref<8x256xf32, #tpu.memory_space<vmem>>) attributes {dimension_semantics = [#tpu.dimension_semantics<parallel>], iteration_bounds = array<i64: 1>, scalar_prefetch = 0 : i64, scratch_operands = 0 : i64, tpu.core_type = #tpu.core_type<tc>, window_params = [{transform_indices = @transform_0, window_bounds = array<i64: 8, 256>}, {transform_indices = @transform_1, window_bounds = array<i64: 8, 1>}, {transform_indices = @transform_2, window_bounds = array<i64: 8, 1>}, {transform_indices = @transform_3, window_bounds = array<i64: 8, 256>}]} {
    %c0 = arith.constant 0 : index
    %c0_0 = arith.constant 0 : index
    %0 = vector.load %arg1[%c0, %c0_0] : memref<8x256xf32, #tpu.memory_space<vmem>>, vector<8x256xf32>
    %cst = arith.constant dense<0.000000e+00> : vector<8xf32>
    %1 = vector.multi_reduction <add>, %0, %cst [1] : vector<8x256xf32> to vector<8xf32>
    %2 = vector.shape_cast %1 : vector<8xf32> to vector<8x1xf32>
    %3 = arith.mulf %0, %0 : vector<8x256xf32>
    %cst_1 = arith.constant dense<0.000000e+00> : vector<8xf32>
    %4 = vector.multi_reduction <add>, %3, %cst_1 [1] : vector<8x256xf32> to vector<8xf32>
    %5 = vector.shape_cast %4 : vector<8xf32> to vector<8x1xf32>
    %cst_2 = arith.constant 3.906250e-03 : f32
    %6 = vector.broadcast %cst_2 : f32 to vector<8x1xf32>
    %7 = arith.mulf %2, %6 : vector<8x1xf32>
    %cst_3 = arith.constant 3.906250e-03 : f32
    %8 = vector.broadcast %cst_3 : f32 to vector<8x1xf32>
    %9 = arith.mulf %5, %8 : vector<8x1xf32>
    %10 = arith.mulf %7, %7 : vector<8x1xf32>
    %11 = arith.subf %9, %10 : vector<8x1xf32>
    %cst_4 = arith.constant 0.000000e+00 : f32
    %12 = vector.broadcast %cst_4 : f32 to vector<8x1xf32>
    %13 = arith.maximumf %11, %12 : vector<8x1xf32>
    %cst_5 = arith.constant 9.99999974E-6 : f32
    %14 = vector.broadcast %cst_5 : f32 to vector<8x1xf32>
    %15 = arith.addf %13, %14 : vector<8x1xf32>
    %16 = math.rsqrt %15 : vector<8x1xf32>
    %c0_6 = arith.constant 0 : index
    %c0_7 = arith.constant 0 : index
    %17 = vector.load %arg2[%c0_6, %c0_7] : memref<8x1xf32, #tpu.memory_space<vmem>>, vector<8x1xf32>
    %18 = arith.mulf %17, %16 : vector<8x1xf32>
    %c0_8 = arith.constant 0 : index
    %c0_9 = arith.constant 0 : index
    %19 = vector.load %arg3[%c0_8, %c0_9] : memref<8x1xf32, #tpu.memory_space<vmem>>, vector<8x1xf32>
    %20 = arith.mulf %7, %18 : vector<8x1xf32>
    %21 = arith.subf %19, %20 : vector<8x1xf32>
    %22 = vector.broadcast %18 : vector<8x1xf32> to vector<8x256xf32>
    %23 = arith.mulf %0, %22 : vector<8x256xf32>
    %24 = vector.broadcast %21 : vector<8x1xf32> to vector<8x256xf32>
    %25 = arith.addf %23, %24 : vector<8x256xf32>
    %c0_10 = arith.constant 0 : index
    %c0_11 = arith.constant 0 : index
    %26 = vector.load %arg4[%c0_10, %c0_11] : memref<8x256xf32, #tpu.memory_space<vmem>>, vector<8x256xf32>
    tpu.vector_store %arg4[%c0_10, %c0_11], %25 {strides = array<i32>} : memref<8x256xf32, #tpu.memory_space<vmem>>, vector<8x256xf32>,
    return
  }
  func.func @transform_0(%arg0: i32) -> (i32, i32) {
    %c0_i32 = arith.constant 0 : i32
    %c0_i32_0 = arith.constant 0 : i32
    return %arg0, %c0_i32 : i32, i32
  }
  func.func @transform_1(%arg0: i32) -> (i32, i32) {
    %c0_i32 = arith.constant 0 : i32
    %c0_i32_0 = arith.constant 0 : i32
    return %arg0, %c0_i32 : i32, i32
  }
  func.func @transform_2(%arg0: i32) -> (i32, i32) {
    %c0_i32 = arith.constant 0 : i32
    %c0_i32_0 = arith.constant 0 : i32
    return %arg0, %c0_i32 : i32, i32
  }
  func.func @transform_3(%arg0: i32) -> (i32, i32) {
    %c0_i32 = arith.constant 0 : i32
    %c0_i32_0 = arith.constant 0 : i32
    return %arg0, %c0_i32 : i32, i32
  }
}

</mosaic_0001>

<llo_original>
// kernel: tpu_custom_call.1
$region0: #{tpu_custom_call.1}
  #allocation0 [shape = 'u32[]', space=smem, size = 0x4, offset = 0x4, fixed_abs, tag = 'smem constant byte address 0x4 - core index']
  #allocation1 [shape = 'u32[144,128]{1,0:T(1,128)}', space=vmem, size = 0x12000, scoped, tag = 'internal scratch']
  %s0 = inlined_call_operand.vmem [shape: f32[8,256], index: 0, kind: input, shape index: {}]
  %s1 = inlined_call_operand.vmem [shape: f32[8,1], index: 1, kind: input, shape index: {}]
  %s2 = inlined_call_operand.vmem [shape: f32[8,1], index: 2, kind: input, shape index: {}]
  %s3 = inlined_call_operand.hbm [shape: f32[8,256], index: 3, kind: output, shape index: {}]
  %s4 = sld [smem:[#allocation0]]
  $region22: #{tpu_custom_call.1} parent=0
    _
  %s6 = ssub.s32 1, %s4
  %s7 = scalar_select 0, %s6, %s4
  $region1: #{tpu_custom_call.1} parent=0
    #allocation2 [shape = 'u8[8192]{0}', space=vmem, size = 0x2000, scoped, tag = 'output window, operand 0, single buffered']
    #allocation3 [shape = 's32[1]{0}', space=sflag, size = 0x4, scoped, tag = 'scoped memory for tpu_custom_call.1']
    %8 = vsyncpa [#allocation3], 0
    // Predicated region
    $region2: #{tpu_custom_call.1} parent=1 // pred_check
      _
    $region3: #{tpu_custom_call.1} parent=1 // pred_check_branch
      %10 = sbr.rel (0) target = $region5
    $region4: #{tpu_custom_call.1} parent=1 // pred_region
      _
    $region5: #{tpu_custom_call.1} parent=1 // pred_fallthru
      _
    // Predicated region
    $region6: #{tpu_custom_call.1} parent=1 // pred_check
      _
    $region7: #{tpu_custom_call.1} parent=1 // pred_check_branch
      %12 = sbr.rel (0) target = $region9
    $region8: #{tpu_custom_call.1} parent=1 // pred_region
      _
    $region9: #{tpu_custom_call.1} parent=1 // pred_fallthru
      _
    // Predicated region
    $region10: #{tpu_custom_call.1} parent=1 // pred_check
      _
    $region11: #{tpu_custom_call.1} parent=1 // pred_check_branch
      %14 = sbr.rel (0) target = $region13
    $region12: #{tpu_custom_call.1} parent=1 // pred_region
      _
    $region13: #{tpu_custom_call.1} parent=1 // pred_fallthru
      _
    %v15 = vld [vmem:[%s0] sm:$0xff]
    %v16 = vld [vmem:[%s0 + $0x8] sm:$0xff]
    %v17 = vadd.f32 %v15, %v16
    %18 = vadd.xlane.f32.xlu0 %v17
    %v19 = vpop.xlane.xlu0 %18
    %v20 = vmul.f32 %v15, %v15
    %v21 = vmul.f32 %v16, %v16
    %v22 = vadd.f32 %v20, %v21
    %23 = vadd.xlane.f32.xlu0 %v22
    %v24 = vpop.xlane.xlu0 %23
    %v25 = vmul.f32 %v19, 0.00390625
    %v26 = vmul.f32 %v24, 0.00390625
    %v27 = vmul.f32 %v25, %v25
    %v28 = vsub.f32 %v26, %v27
    %v29 = vmax.f32 %v28, 0.0
    %v30 = vadd.f32 %v29, 1e-05
    %v31 = vrsqrt.pop %v30
    %v32 = vld [vmem:[%s1] sm:$0xff]
    %v33 = vmul.f32 %v32, %v31
    %v34 = vld [vmem:[%s2] sm:$0xff]
    %v35 = vmul.f32 %v25, %v33
    %v36 = vsub.f32 %v34, %v35
    %38 = vset.pattern.permute.xlu0 0
    %39 = vperm.xlu0 %38, %v33
    %v40 = vpop.permute.xlu0 %39
    %v42 = vmul.f32 %v15, %v40
    %v43 = vmul.f32 %v16, %v40
    %45 = vset.pattern.permute.xlu0 0
    %46 = vperm.xlu0 %45, %v36
    %v47 = vpop.permute.xlu0 %46
    %v49 = vadd.f32 %v42, %v47
    %v50 = vadd.f32 %v43, %v47
    %51 = vst [vmem:[#allocation2] sm:$0xff] %v49
    %52 = vst [vmem:[#allocation2 + $0x8] sm:$0xff] %v50
    // Predicated region
    $region14: #{tpu_custom_call.1} parent=1 // pred_check
      _
    $region15: #{tpu_custom_call.1} parent=1 // pred_check_branch
      %54 = sbr.rel (0) target = $region17
    $region16: #{tpu_custom_call.1} parent=1 // pred_region
      %s56 = ssub.s32 256, 256
      %57 = vsyncadd [#allocation3], %s56
      %s59 = sshll.u32 [#allocation2], 4
      %s60 = int_to_ptr.vmem [resolvable:$true] %s59
      %62 = dma.vmem_to_hbm [thread:$0]  %s60, 256, %s3, [#allocation3]
    $region17: #{tpu_custom_call.1} parent=1 // pred_fallthru
      _
    // Predicated region
    $region18: #{tpu_custom_call.1} parent=1 // pred_check
      _
    $region19: #{tpu_custom_call.1} parent=1 // pred_check_branch
      %64 = sbr.rel (0) target = $region21
    $region20: #{tpu_custom_call.1} parent=1 // pred_region
      %65 = dma.done [#allocation3], 256
    $region21: #{tpu_custom_call.1} parent=1 // pred_fallthru
      _
    %66 = vsyncpa [#allocation3], 1

</llo_original>
